<compile_context>
chip_gen: v5e
topology: v5e:2x2
jax: 0.10.0
libtpu: 0.0.40
codegen_flags: <defaults>
</compile_context>

<pallas_src>
import jax
import jax.numpy as jnp
from jax.experimental import pallas as pl
from jax.experimental.pallas import tpu as pltpu


def _round_up(x, m):
    return (x + m - 1) // m * m


def _engine_kernel(w_ref, p_ref, o_ref):
    """One M-tile of the TRT-engine hot path: fused (bias-folded) matmul + ReLU.

    w_ref: (Cout, K_pad)   compute dtype, bias folded in as an extra K column.
    p_ref: (K_pad, TM)     compute dtype, transposed im2col patches (M on lanes).
    o_ref: (Cout, TM)      f32, lane-dense output tile.
    """
    acc = jnp.dot(w_ref[...], p_ref[...], preferred_element_type=jnp.float32)
    o_ref[...] = jnp.maximum(acc, 0.0).astype(o_ref.dtype)


def _run_engine_pallas(w_aug, patches_t, *, tile_m):
    """w_aug: (Cout, K_pad), patches_t: (K_pad, M_pad) -> (Cout, M_pad) f32."""
    Cout, K_pad = w_aug.shape
    _, M_pad = patches_t.shape
    assert M_pad % tile_m == 0
    grid_m = M_pad // tile_m

    bytes_accessed = int(
        w_aug.size * w_aug.dtype.itemsize
        + patches_t.size * patches_t.dtype.itemsize
        + Cout * M_pad * 4
    )

    return pl.pallas_call(
        _engine_kernel,
        out_shape=jax.ShapeDtypeStruct((Cout, M_pad), jnp.float32),
        grid_spec=pltpu.PrefetchScalarGridSpec(
            num_scalar_prefetch=0,
            grid=(grid_m,),
            in_specs=[
                # Weights: tiny, constant block (revisited, DMA'd once).
                pl.BlockSpec((Cout, K_pad), lambda i: (0, 0)),
                # Patches: disjoint lane-dense M tiles -> pipelined DMA.
                pl.BlockSpec((K_pad, tile_m), lambda i: (0, i)),
            ],
            out_specs=pl.BlockSpec((Cout, tile_m), lambda i: (0, i)),
        ),
        compiler_params=pltpu.CompilerParams(
            # Independent M tiles: megacore-shardable on v7x, free elsewhere.
            dimension_semantics=("parallel",),
            # Explicit VMEM budget (safe on v7x's 64 MiB physical VMEM).
            vmem_limit_bytes=64 * 1024 * 1024,
        ),
        cost_estimate=pl.CostEstimate(
            flops=2 * M_pad * K_pad * Cout,
            transcendentals=0,
            bytes_accessed=bytes_accessed,
        ),
    )(w_aug, patches_t)


def _im2col_t_nchw(x_nchw, kh, kw, pad):
    """NCHW input -> TRANSPOSED patch matrix (Cin*kh*kw, N*H*W), stride 1, 'same'.

    Row order is (dy, dx) outer, channel inner, matching the weight layout
    transpose(weight, (0, 2, 3, 1)).reshape(Cout, KH*KW*Cin).
    """
    N, C, H, W = x_nchw.shape
    x_nhwc = jnp.transpose(x_nchw, (0, 2, 3, 1))                 # N,H,W,C
    x_pad = jnp.pad(x_nhwc, ((0, 0), (pad, pad), (pad, pad), (0, 0)))
    rows = []
    for dy in range(kh):
        for dx in range(kw):
            sl = x_pad[:, dy:dy + H, dx:dx + W, :]               # N,H,W,C
            rows.append(jnp.transpose(sl, (3, 0, 1, 2)).reshape(C, N * H * W))
    return jnp.concatenate(rows, axis=0), (N, H, W)              # (kh*kw*C, M)


class TRTModulePallas:
    """Mirrors TRTModule's calling convention: forward(*inputs) -> output(s)."""

    def __init__(self, engine_params, input_names=None, output_names=None,
                 tile_m=256, compute_dtype=jnp.bfloat16):
        # engine_params stands in for the serialized TRT engine.
        self.w = engine_params["weight"]     # (Cout, Cin, KH, KW)
        self.b = engine_params["bias"]       # (Cout,)
        self.input_names = input_names or ["input_0"]
        self.output_names = output_names or ["output_0"]
        assert tile_m % 128 == 0, "tile_m must be a multiple of 128 (lane width)"
        self.tile_m = tile_m
        # bf16 halves HBM traffic of the im2col patches; accumulation stays f32.
        # (On v5e/v6e int8 and on v7x fp8 would halve it again if quantizable.)
        self.compute_dtype = compute_dtype

    def forward(self, *inputs):
        x = inputs[0]                                            # NCHW
        Cout, Cin, KH, KW = self.w.shape
        patches_t, (N, H, W) = _im2col_t_nchw(x, KH, KW, pad=KH // 2)
        K = Cin * KH * KW
        M = N * H * W

        # Fold bias into the contraction: extra ones-row in patches, bias column in W.
        w_t = jnp.transpose(self.w, (0, 2, 3, 1)).reshape(Cout, K)      # (Cout, K)
        w_aug = jnp.concatenate([w_t, self.b.reshape(Cout, 1)], axis=1)  # (Cout, K+1)
        patches_aug = jnp.concatenate(
            [patches_t, jnp.ones((1, M), patches_t.dtype)], axis=0)      # (K+1, M)

        # Pad K+1 to a multiple of 16 (bf16 sublane packing) and M to the tile size.
        k_pad = _round_up(K + 1, 16)
        m_pad = _round_up(M, self.tile_m)
        w_aug = jnp.pad(w_aug, ((0, 0), (0, k_pad - (K + 1))))
        patches_aug = jnp.pad(patches_aug, ((0, k_pad - (K + 1)), (0, m_pad - M)))

        out_t = _run_engine_pallas(
            w_aug.astype(self.compute_dtype),
            patches_aug.astype(self.compute_dtype),
            tile_m=self.tile_m,
        )                                                        # (Cout, M_pad) f32

        # Lane-dense (Cout, M) result -> NCHW with a single transpose.
        out = out_t[:, :M].reshape(Cout, N, H, W)
        out_nchw = jnp.transpose(out, (1, 0, 2, 3))
        outputs = (out_nchw,)
        if len(outputs) == 1:
            return outputs[0]
        return outputs

    __call__ = forward


def _reference_forward(x, w, b, compute_dtype):
    """Plain-JAX reference for the synthetic engine (conv + bias + ReLU).

    Inputs are quantized to the kernel's compute dtype so the comparison is
    apples-to-apples; accumulation is f32 in both paths.
    """
    xq = x.astype(compute_dtype).astype(jnp.float32)
    wq = w.astype(compute_dtype).astype(jnp.float32)
    bq = b.astype(compute_dtype).astype(jnp.float32)
    y = jax.lax.conv_general_dilated(
        xq, wq, window_strides=(1, 1), padding="SAME",
        dimension_numbers=("NCHW", "OIHW", "NCHW"),
    )
    y = y + bq.reshape(1, -1, 1, 1)
    return jnp.maximum(y, 0.0)


if __name__ == "__main__":
    key = jax.random.PRNGKey(0)
    kx, kw, kb = jax.random.split(key, 3)

    N, Cin, H, W = 2, 4, 16, 16
    Cout, KH, KW = 8, 3, 3

    x = jax.random.normal(kx, (N, Cin, H, W), dtype=jnp.float32)
    weight = jax.random.normal(kw, (Cout, Cin, KH, KW), dtype=jnp.float32) * 0.1
    bias = jax.random.normal(kb, (Cout,), dtype=jnp.float32) * 0.1

    module = TRTModulePallas(
        {"weight": weight, "bias": bias},
        input_names=["input_0"],
        output_names=["output_0"],
        tile_m=256,                      # M = 512 here -> grid = (2,)
        compute_dtype=jnp.bfloat16,
    )

    out = jax.block_until_ready(module(x))
    ref = jax.block_until_ready(
        _reference_forward(x, weight, bias, jnp.bfloat16))

    assert out.shape == (N, Cout, H, W), out.shape
    max_err = float(jnp.max(jnp.abs(out - ref)))
    assert jnp.allclose(out, ref, atol=2e-3, rtol=2e-3), max_err
    print("KERNEL_OK")
</pallas_src>

<mosaic_0001>
module attributes {stable_mosaic.version = 11 : i64} {
  func.func @_engine_kernel(%arg0: i32, %arg1: memref<8x48xbf16, #tpu.memory_space<vmem>>, %arg2: memref<48x256xbf16, #tpu.memory_space<vmem>>, %arg3: memref<8x256xf32, #tpu.memory_space<vmem>>) attributes {dimension_semantics = [#tpu.dimension_semantics<parallel>], iteration_bounds = array<i64: 2>, scalar_prefetch = 0 : i64, scratch_operands = 0 : i64, tpu.core_type = #tpu.core_type<tc>, window_params = [{pipeline_mode = #tpu.pipeline_mode<synchronous>, transform_indices = @transform_0, window_bounds = array<i64: 8, 48>}, {transform_indices = @transform_1, window_bounds = array<i64: 48, 256>}, {transform_indices = @transform_2, window_bounds = array<i64: 8, 256>}]} {
    %c0 = arith.constant 0 : index
    %c0_0 = arith.constant 0 : index
    %0 = vector.load %arg1[%c0, %c0_0] : memref<8x48xbf16, #tpu.memory_space<vmem>>, vector<8x48xbf16>
    %c0_1 = arith.constant 0 : index
    %c0_2 = arith.constant 0 : index
    %1 = vector.load %arg2[%c0_1, %c0_2] : memref<48x256xbf16, #tpu.memory_space<vmem>>, vector<48x256xbf16>
    %cst = arith.constant dense<0.000000e+00> : vector<8x256xf32>
    %2 = tpu.matmul %0, %1, %cst {dimension_numbers = #tpu.dot_dimension_numbers<[1], [0], [0], [1], [0, 0, 1, 1], [], []>} : vector<8x48xbf16>, vector<48x256xbf16>, vector<8x256xf32> -> vector<8x256xf32>
    %cst_3 = arith.constant 0.000000e+00 : f32
    %3 = vector.broadcast %cst_3 : f32 to vector<8x256xf32>
    %4 = arith.maximumf %2, %3 : vector<8x256xf32>
    %c0_4 = arith.constant 0 : index
    %c0_5 = arith.constant 0 : index
    %5 = vector.load %arg3[%c0_4, %c0_5] : memref<8x256xf32, #tpu.memory_space<vmem>>, vector<8x256xf32>
    tpu.vector_store %arg3[%c0_4, %c0_5], %4 {strides = array<i32>} : memref<8x256xf32, #tpu.memory_space<vmem>>, vector<8x256xf32>,
    return
  }
  func.func @transform_0(%arg0: i32) -> (i32, i32) {
    %c0_i32 = arith.constant 0 : i32
    %c0_i32_0 = arith.constant 0 : i32
    %c0_i32_1 = arith.constant 0 : i32
    return %c0_i32, %c0_i32_0 : i32, i32
  }
  func.func @transform_1(%arg0: i32) -> (i32, i32) {
    %c0_i32 = arith.constant 0 : i32
    %c0_i32_0 = arith.constant 0 : i32
    return %c0_i32, %arg0 : i32, i32
  }
  func.func @transform_2(%arg0: i32) -> (i32, i32) {
    %c0_i32 = arith.constant 0 : i32
    %c0_i32_0 = arith.constant 0 : i32
    return %c0_i32, %arg0 : i32, i32
  }
}

</mosaic_0001>

<llo_original>
// kernel: tpu_custom_call.1
$region0: #{tpu_custom_call.1}
  #allocation0 [shape = 'u32[]', space=smem, size = 0x4, offset = 0x4, fixed_abs, tag = 'smem constant byte address 0x4 - core index']
  #allocation1 [shape = 'u32[72,128]{1,0:T(1,128)}', space=vmem, size = 0x9000, scoped, tag = 'internal scratch']
  %s0 = inlined_call_operand.hbm [shape: bf16[8,48], index: 0, kind: input, shape index: {}]
  %s1 = inlined_call_operand.hbm [shape: bf16[48,512], index: 1, kind: input, shape index: {}]
  %s2 = inlined_call_operand.hbm [shape: f32[8,512], index: 2, kind: output, shape index: {}]
  %s3 = sld [smem:[#allocation0]]
  $region49: #{tpu_custom_call.1} parent=0
    _
  %s5 = ssub.s32 1, %s3
  %s6 = scalar_select 0, %s5, %s3
  $region1: #{tpu_custom_call.1} parent=0
    #allocation2 [shape = 'u8[2048]{0}', space=vmem, size = 0x800, scoped, tag = 'input window, operand 0, single buffered']
    #allocation3 [shape = 's32[2]{0}', space=sflag, size = 0x8, scoped, tag = 'scoped memory for tpu_custom_call.1']
    #allocation4 [shape = 's32[2]{0}', space=sflag, size = 0x8, scoped, tag = 'scoped memory for tpu_custom_call.1']
    #allocation5 [shape = 'u8[49152]{0}', space=vmem, size = 0xc000, scoped, tag = 'input window, operand 1']
    #allocation6 [shape = 's32[2]{0}', space=sflag, size = 0x8, scoped, tag = 'scoped memory for tpu_custom_call.1']
    #allocation7 [shape = 'u8[16384]{0}', space=vmem, size = 0x4000, scoped, tag = 'output window, operand 0']
    %7 = vsyncpa [#allocation3], 0
    %8 = vsyncpa [#allocation6], 0
    %s9 = scalar_lea.sflag [#allocation6], 1
    %10 = vsyncpa %s9, 0
    %11 = vsyncpa [#allocation4], 0
    %s12 = scalar_lea.sflag [#allocation4], 1
    %13 = vsyncpa %s12, 0
    loop: start=0, step=1, limit=4
    $region2: #{tpu_custom_call.1} parent=1 // loop_pre_header
      _
    $region3: #{tpu_custom_call.1} parent=1 // loop_header
      %s15 = sphi 0, %s19
      %p16 = scmp.ge.s32.totalorder %s15, 4
      %s23 = sphi 0, %s23
      %s25 = sphi 0, %s23
      %s26 = sphi 0, %s25
      %s40 = sphi 0, %s26
      %s46 = sphi 0, %s48
      %s49 = sphi 0, %s46
      %s50 = sphi 0, %s49
      %s66 = sphi 0, %s50
      %s72 = sphi 0, %s74
      %s75 = sphi 0, %s72
      %s76 = sphi 0, %s75
      %s92 = sphi 0, %s76
    $region4: #{tpu_custom_call.1} parent=1 // loop_header_branch
      %18 = sbr.rel (%p16) target = $region8
    $region5: #{tpu_custom_call.1} parent=1 // loop_body
      %s20 = ssub.s32 %s15, 1
      %s21 = ssub.s32 %s15, 2
      %s22 = sadd.s32 %s15, 1
      %s24 = sadd.s32 %s23, 1
      %p27 = scmp.eq.s32.totalorder %s15, 1
      %p28 = scmp.ne.s32.totalorder %s23, %s25
      %p29 = scmp.eq.s32.totalorder %s15, 0
      %p30 = por %p28, %p29
      %p31 = scmp.ne.s32.totalorder %s23, %s25
      %p32 = scmp.eq.s32.totalorder %s20, 1
      %p33 = por %p31, %p32
      %p34 = scmp.ne.s32.totalorder %s25, %s26
      %p35 = scmp.eq.s32.totalorder %s20, 0
      %p36 = por %p34, %p35
      %p37 = scmp.ne.s32.totalorder %s25, %s26
      %p38 = scmp.eq.s32.totalorder %s21, 1
      %p39 = por %p37, %p38
      %p41 = scmp.ne.s32.totalorder %s26, %s40
      %p42 = scmp.eq.s32.totalorder %s21, 0
      %p43 = por %p41, %p42
      %s44 = ssub.s32 %s15, %s22
      %p45 = scmp.eq.s32.totalorder %s44, 0
      %s47 = sadd.s32 %s46, 1
      %s48 = scalar_select %p45, %s46, %s47
      %p51 = pneg %p45
      %p52 = scmp.eq.s32.totalorder %s15, 1
      %p53 = por %p51, %p52
      %p54 = scmp.ne.s32.totalorder %s46, %s49
      %p55 = scmp.eq.s32.totalorder %s15, 0
      %p56 = por %p54, %p55
      %p57 = scmp.ne.s32.totalorder %s46, %s49
      %p58 = scmp.eq.s32.totalorder %s20, 1
      %p59 = por %p57, %p58
      %p60 = scmp.ne.s32.totalorder %s49, %s50
      %p61 = scmp.eq.s32.totalorder %s20, 0
      %p62 = por %p60, %p61
      %p63 = scmp.ne.s32.totalorder %s49, %s50
      %p64 = scmp.eq.s32.totalorder %s21, 1
      %p65 = por %p63, %p64
      %p67 = scmp.ne.s32.totalorder %s50, %s66
      %p68 = scmp.eq.s32.totalorder %s21, 0
      %p69 = por %p67, %p68
      %s70 = ssub.s32 %s15, %s22
      %p71 = scmp.eq.s32.totalorder %s70, 0
      %s73 = sadd.s32 %s72, 1
      %s74 = scalar_select %p71, %s72, %s73
      %p77 = pneg %p71
      %p78 = scmp.eq.s32.totalorder %s15, 1
      %p79 = por %p77, %p78
      %p80 = scmp.ne.s32.totalorder %s72, %s75
      %p81 = scmp.eq.s32.totalorder %s15, 0
      %p82 = por %p80, %p81
      %p83 = scmp.ne.s32.totalorder %s72, %s75
      %p84 = scmp.eq.s32.totalorder %s20, 1
      %p85 = por %p83, %p84
      %p86 = scmp.ne.s32.totalorder %s75, %s76
      %p87 = scmp.eq.s32.totalorder %s20, 0
      %p88 = por %p86, %p87
      %p89 = scmp.ne.s32.totalorder %s75, %s76
      %p90 = scmp.eq.s32.totalorder %s21, 1
      %p91 = por %p89, %p90
      %p93 = scmp.ne.s32.totalorder %s76, %s92
      %p94 = scmp.eq.s32.totalorder %s21, 0
      %p95 = por %p93, %p94
      %p96 = scmp.le.s32.totalorder 1, %s15
      %p97 = scmp.lt.s32.totalorder %s15, 3
      %p98 = pnand %p96, %p97
      %p99 = pneg %p98
      // Predicated region
      $region9: #{tpu_custom_call.1} parent=5 // pred_check
        _
      $region10: #{tpu_custom_call.1} parent=5 // pred_check_branch
        %101 = sbr.rel (%p98) target = $region12
      $region11: #{tpu_custom_call.1} parent=5 // pred_region
        %s102 = ssub.s32 %s15, 1
        // Predicated region
        $region13: #{tpu_custom_call.1} parent=11 // pred_check
          %p103 = pneg %p36
        $region14: #{tpu_custom_call.1} parent=11 // pred_check_branch
          %105 = sbr.rel (%p103) target = $region16
        $region15: #{tpu_custom_call.1} parent=11 // pred_region
          %107 = vsyncadd [#allocation3], 0
          %s109 = sshll.u32 %s0, 4
          %s110 = int_to_ptr.hbm [resolvable:$true] %s109
          %s111 = sshll.u32 [#allocation2], 4
          %s112 = int_to_ptr.vmem [resolvable:$true] %s111
          %114 = dma.hbm_to_vmem [thread:$0]  %s110, 64, %s112, [#allocation3]
        $region16: #{tpu_custom_call.1} parent=11 // pred_fallthru
          _
      $region12: #{tpu_custom_call.1} parent=5 // pred_fallthru
        _
      %p115 = scmp.lt.s32.totalorder %s15, 2
      // Predicated region
      $region17: #{tpu_custom_call.1} parent=5 // pred_check
        %p116 = pneg %p115
      $region18: #{tpu_custom_call.1} parent=5 // pred_check_branch
        %118 = sbr.rel (%p116) target = $region20
      $region19: #{tpu_custom_call.1} parent=5 // pred_region
        // Predicated region
        $region21: #{tpu_custom_call.1} parent=19 // pred_check
          %p119 = pneg %p56
        $region22: #{tpu_custom_call.1} parent=19 // pred_check_branch
          %121 = sbr.rel (%p119) target = $region24
        $region23: #{tpu_custom_call.1} parent=19 // pred_region
          %s122 = sand.u32 %s46, 1
          %s123 = scalar_lea.sflag [#allocation6], %s122
          %s124 = sand.u32 %s46, 1
          %s125 = smul.addr %s124, 48
          %s126 = scalar_lea.vmem [#allocation5], %s125
          %s127 = smul.u32 2, %s15
          %129 = vsyncadd %s123, 0
          %s130 = smul.addr %s127, 4
          %s131 = scalar_lea.hbm %s1, %s130
          %s132 = sshll.u32 %s131, 4
          %s133 = int_to_ptr.hbm [resolvable:$true] %s132
          %s134 = sshll.u32 %s126, 4
          %s135 = int_to_ptr.vmem [resolvable:$true] %s134
          %140 = dma.hbm_to_vmem [thread:$0]  %s133, 768, %s135, %s123, 256, 128, 8
        $region24: #{tpu_custom_call.1} parent=19 // pred_fallthru
          _
      $region20: #{tpu_custom_call.1} parent=5 // pred_fallthru
        _
      %p141 = scmp.le.s32.totalorder 1, %s15
      %p142 = scmp.lt.s32.totalorder %s15, 3
      %p143 = pnand %p141, %p142
      %p144 = pneg %p143
      // Predicated region
      $region25: #{tpu_custom_call.1} parent=5 // pred_check
        _
      $region26: #{tpu_custom_call.1} parent=5 // pred_check_branch
        %146 = sbr.rel (%p143) target = $region28
      $region27: #{tpu_custom_call.1} parent=5 // pred_region
        %s147 = ssub.s32 %s15, 1
        // Predicated region
        $region29: #{tpu_custom_call.1} parent=27 // pred_check
          %p148 = pneg %p36
        $region30: #{tpu_custom_call.1} parent=27 // pred_check_branch
          %150 = sbr.rel (%p148) target = $region32
        $region31: #{tpu_custom_call.1} parent=27 // pred_region
          %152 = dma.done [#allocation3], 64
        $region32: #{tpu_custom_call.1} parent=27 // pred_fallthru
          _
        %s153 = sand.u32 %s49, 1
        %s154 = scalar_lea.sflag [#allocation6], %s153
        %s155 = sand.u32 %s49, 1
        %s156 = smul.addr %s155, 48
        %s157 = scalar_lea.vmem [#allocation5], %s156
        // Predicated region
        $region33: #{tpu_custom_call.1} parent=27 // pred_check
          %p158 = pneg %p62
        $region34: #{tpu_custom_call.1} parent=27 // pred_check_branch
          %160 = sbr.rel (%p158) target = $region36
        $region35: #{tpu_custom_call.1} parent=27 // pred_region
          %162 = dma.done %s154, 768
        $region36: #{tpu_custom_call.1} parent=27 // pred_fallthru
          _
        %p163 = pneg %p36
        %p164 = pneg %p33
        %s165 = sand.u32 %s49, 1
        %s166 = scalar_lea.sflag [#allocation6], %s165
        %s167 = sand.u32 %s49, 1
        %s168 = smul.addr %s167, 48
        %s169 = scalar_lea.vmem [#allocation5], %s168
        %p170 = pneg %p62
        %p171 = pneg %p59
        %p172 = pneg %p88
        %p173 = pneg %p85
        %s174 = sand.u32 %s75, 1
        %s175 = scalar_lea.sflag [#allocation4], %s174
        %s176 = sand.u32 %s75, 1
        %s177 = smul.addr %s176, 16
        %s178 = scalar_lea.vmem [#allocation7], %s177
        %s179 = smul.u32 2, %s20
        %s180 = smul.u32 2, %s20
        %v182 = vld [vmem:[#allocation2] sm:$0xf]
        %v183 = vld [vmem:[%s157] sm:$0xff]
        %v184 = vld [vmem:[%s157 + $0x8] sm:$0xff]
        %v185 = vld [vmem:[%s157 + $0x10] sm:$0xff]
        %v186 = vld [vmem:[%s157 + $0x18] sm:$0xff]
        %v187 = vld [vmem:[%s157 + $0x20] sm:$0xff]
        %v188 = vld [vmem:[%s157 + $0x28] sm:$0xff]
        %v195 = vunpack.c.l.b16 %v183
        %v196 = vunpack.c.h.b16 %v183
        %v197 = vunpack.c.l.b16 %v184
        %v198 = vunpack.c.h.b16 %v184
        %v199 = vunpack.c.l.b16 %v185
        %v200 = vunpack.c.h.b16 %v185
        %v201 = vunpack.c.l.b16 %v186
        %v202 = vunpack.c.h.b16 %v186
        %v203 = vunpack.c.l.b16 %v187
        %v204 = vunpack.c.h.b16 %v187
        %v205 = vunpack.c.l.b16 %v188
        %v206 = vunpack.c.h.b16 %v188
        %v207 = vpack.c.b16 %v197, %v195
        %v208 = vpack.c.b16 %v198, %v196
        %v209 = vpack.c.b16 %v201, %v199
        %v210 = vpack.c.b16 %v202, %v200
        %v211 = vpack.c.b16 %v205, %v203
        %v212 = vpack.c.b16 %v206, %v204
        %vm219 = vcmask 392192
        %v221 = vsel %vm219, %v182, 0
        %223 = vmatpush.bf16.msra.mxu0 0
        %224 = vmatpush.bf16.msra.mxu0 0
        %225 = vmatpush.bf16.msra.mxu0 0
        %226 = vmatpush.bf16.msra.mxu0 0
        %227 = vmatpush.bf16.msra.mxu0 0
        %228 = vmatpush.bf16.msra.mxu0 %v211
        %229 = vmatpush.bf16.msra.mxu0 %v209
        %230 = vmatpush.bf16.msra.mxu0 %v207
        %231 = vmatmul.bf16.gmra.mxu0 %v221
        %v232 = vpop.f32.mrf.mxu0
        %v233 = vadd.f32 0.0, %v232
        %v234 = vpop.f32.mrf.mxu0
        %235 = vdwg.mxu0
        %236 = vmatpush.bf16.msra.mxu0 0
        %237 = vmatpush.bf16.msra.mxu0 0
        %238 = vmatpush.bf16.msra.mxu0 0
        %239 = vmatpush.bf16.msra.mxu0 0
        %240 = vmatpush.bf16.msra.mxu0 0
        %241 = vmatpush.bf16.msra.mxu0 %v212
        %242 = vmatpush.bf16.msra.mxu0 %v210
        %243 = vmatpush.bf16.msra.mxu0 %v208
        %244 = vmatmul.bf16.gmra.mxu0 %v221
        %v245 = vpop.f32.mrf.mxu0
        %v246 = vadd.f32 0.0, %v245
        %v247 = vpop.f32.mrf.mxu0
        %248 = vdwg.mxu0
        %v249 = vmax.f32 %v233, 0.0
        %v250 = vmax.f32 %v246, 0.0
        %251 = vst [vmem:[%s178] sm:$0xff] %v249
        %252 = vst [vmem:[%s178 + $0x8] sm:$0xff] %v250
        %s253 = sand.u32 %s75, 1
        %s254 = scalar_lea.sflag [#allocation4], %s253
        %s255 = sand.u32 %s75, 1
        %s256 = smul.addr %s255, 16
        %s257 = scalar_lea.vmem [#allocation7], %s256
        // Predicated region
        $region37: #{tpu_custom_call.1} parent=27 // pred_check
          %p258 = pneg %p85
        $region38: #{tpu_custom_call.1} parent=27 // pred_check_branch
          %260 = sbr.rel (%p258) target = $region40
        $region39: #{tpu_custom_call.1} parent=27 // pred_region
          %s261 = smul.u32 2, %s20
          %263 = vsyncadd %s254, 0
          %s264 = smul.addr %s261, 8
          %s265 = scalar_lea.hbm %s2, %s264
          %s267 = sshll.u32 %s257, 4
          %s268 = int_to_ptr.vmem [resolvable:$true] %s267
          %s269 = sshll.u32 %s265, 4
          %s270 = int_to_ptr.hbm [resolvable:$true] %s269
          %272 = dma.vmem_to_hbm [thread:$0]  %s268, 256, %s270, %s254
        $region40: #{tpu_custom_call.1} parent=27 // pred_fallthru
          _
      $region28: #{tpu_custom_call.1} parent=5 // pred_fallthru
        _
      %p273 = scmp.le.s32.totalorder 2, %s15
      // Predicated region
      $region41: #{tpu_custom_call.1} parent=5 // pred_check
        %p274 = pneg %p273
      $region42: #{tpu_custom_call.1} parent=5 // pred_check_branch
        %276 = sbr.rel (%p274) target = $region44
      $region43: #{tpu_custom_call.1} parent=5 // pred_region
        %s277 = ssub.s32 %s15, 2
        // Predicated region
        $region45: #{tpu_custom_call.1} parent=43 // pred_check
          %p278 = pneg %p91
        $region46: #{tpu_custom_call.1} parent=43 // pred_check_branch
          %280 = sbr.rel (%p278) target = $region48
        $region47: #{tpu_custom_call.1} parent=43 // pred_region
          %s281 = sand.u32 %s76, 1
          %s282 = scalar_lea.sflag [#allocation4], %s281
          %s283 = sand.u32 %s76, 1
          %s284 = smul.addr %s283, 16
          %s285 = scalar_lea.vmem [#allocation7], %s284
          %287 = dma.done %s282, 256
        $region48: #{tpu_custom_call.1} parent=43 // pred_fallthru
          _
      $region44: #{tpu_custom_call.1} parent=5 // pred_fallthru
        _
    $region6: #{tpu_custom_call.1} parent=1 // loop_footer
      %s19 = sadd.s32 1, %s15
    $region7: #{tpu_custom_call.1} parent=1 // loop_footer_branch
      %14 = sbr.rel target = $region3
    $region8: #{tpu_custom_call.1} parent=1 // loop_exit
      _
    %288 = vsyncpa [#allocation3], 1
    %s289 = scalar_lea.sflag [#allocation3], 1
    %290 = vsyncpa %s289, 1
    %291 = vsyncpa [#allocation6], 1
    %s292 = scalar_lea.sflag [#allocation6], 1
    %293 = vsyncpa %s292, 1
    %294 = vsyncpa [#allocation4], 1
    %s295 = scalar_lea.sflag [#allocation4], 1
    %296 = vsyncpa %s295, 1

</llo_original>
